<compile_context>
chip_gen: v7x
topology: tpu7x:2x2x1
jax: 0.10.0
libtpu: 0.0.40
codegen_flags: <defaults>
</compile_context>

<pallas_src>
from typing import Callable, Optional, Tuple, Union

import numpy as np
import jax
import jax.numpy as jnp
from jax.experimental import pallas as pl
from jax.experimental.pallas import tpu as pltpu

Axes = Union[int, Tuple[int, ...]]

_MiB = 1 << 20

# Streaming-path default tiles (bf16 compute, f32 out):
#   2*(tm*tk + tk*tn)*2B + 2*tm*tn*4B + bias  ~ 6 MiB
# -> fits even v5e's 16 MiB default scoped VMEM; we still set
#    vmem_limit_bytes explicitly (32-48 MiB) to leave pipelining headroom and
#    stay well under v7x's 64 MiB physical VMEM.
_TM, _TN, _TK = 512, 512, 1024

# Weights up to this many (compute-dtype) bytes stay fully resident in VMEM.
_WEIGHT_RESIDENT_MAX_BYTES = 6 * _MiB
# Total VMEM footprint budget used when sizing the resident-path M tile.
_RESIDENT_VMEM_BUDGET = 24 * _MiB


def _round_up(x: int, m: int) -> int:
    return ((x + m - 1) // m) * m


def _sublane_multiple(dtype) -> int:
    # vregs pack sub-32-bit dtypes along sublanes: f32 -> 8, bf16 -> 16, i8 -> 32.
    return 32 // jnp.dtype(dtype).itemsize


def _pick_tile_m(M: int, tm_max: int, mult: int) -> int:
    """Pick an M tile from a ladder, minimizing padded rows (with a mild
    preference for larger tiles when the extra padding is negligible)."""
    m_al = _round_up(M, mult)
    if m_al <= tm_max:
        return m_al
    cands = []
    c = tm_max
    while c >= mult:
        cands.append(max(_round_up(c, mult), mult))
        c //= 2
    cands = sorted(set(cands))
    mps = {c: _round_up(M, c) for c in cands}
    min_mp = min(mps.values())
    thresh = min_mp + max(min_mp // 8, mult)
    ok = [c for c in cands if mps[c] <= thresh]
    return max(ok)


def _vmem_limit(footprint_bytes: int) -> int:
    return int(min(max(footprint_bytes * 3 // 2 + 2 * _MiB, 32 * _MiB), 48 * _MiB))


# ---------------------------------------------------------------------------
# Pallas kernels
# ---------------------------------------------------------------------------
def _linear_resident_kernel(x_ref, w_ref, b_ref, o_ref):
    # Full-K dot per M tile; weight + bias resident in VMEM. f32 accumulation.
    acc = jnp.dot(x_ref[...], w_ref[...], preferred_element_type=jnp.float32)
    o_ref[...] = (acc + b_ref[...]).astype(o_ref.dtype)


def _linear_stream_kernel_f32(x_ref, w_ref, b_ref, o_ref):
    # f32 output: the output block (resident across k) IS the accumulator.
    k = pl.program_id(2)

    @pl.when(k == 0)
    def _():
        o_ref[...] = jnp.zeros_like(o_ref)

    o_ref[...] += jnp.dot(x_ref[...], w_ref[...],
                          preferred_element_type=jnp.float32)

    @pl.when(k == pl.num_programs(2) - 1)
    def _():
        o_ref[...] += b_ref[...]


def _linear_stream_kernel_acc(x_ref, w_ref, b_ref, o_ref, acc_ref):
    # Narrow output dtypes: keep a separate f32 VMEM accumulator.
    k = pl.program_id(2)

    @pl.when(k == 0)
    def _():
        acc_ref[...] = jnp.zeros_like(acc_ref)

    acc_ref[...] += jnp.dot(x_ref[...], w_ref[...],
                            preferred_element_type=jnp.float32)

    @pl.when(k == pl.num_programs(2) - 1)
    def _():
        o_ref[...] = (acc_ref[...] + b_ref[...]).astype(o_ref.dtype)


# ---------------------------------------------------------------------------
# PallasLinear: nn.Linear(D, Dout) forward over the last dim (y = x @ W^T + b)
# ---------------------------------------------------------------------------
class PallasLinear:
    contracts_last_dim_only = True  # enables the Bmap fast path

    def __init__(self, weight: jax.Array, bias: jax.Array, *,
                 compute_dtype: Optional[jnp.dtype] = jnp.bfloat16,
                 tm: int = _TM, tn: int = _TN, tk: int = _TK,
                 weight_resident_max_bytes: int = _WEIGHT_RESIDENT_MAX_BYTES):
        # weight arrives in torch layout (Dout, D).
        dout, d = int(weight.shape[0]), int(weight.shape[1])
        self.d, self.dout = d, dout
        self.compute_dtype = (jnp.dtype(compute_dtype)
                              if compute_dtype is not None else None)

        w = jnp.transpose(weight)                      # (D, Dout)
        if self.compute_dtype is not None:
            w = w.astype(self.compute_dtype)
        witem = w.dtype.itemsize
        self.mult = _sublane_multiple(w.dtype)

        np_lane = _round_up(dout, 128)
        self.resident = (d * np_lane * witem) <= weight_resident_max_bytes

        b_f32 = bias.reshape(1, dout).astype(jnp.float32)

        if self.resident:
            # Pad only the lane (N) dim once; K stays at full D (a full-dim
            # block satisfies the (8,128) rule, so x never needs K padding).
            self.np_pad = np_lane
            self.kp = d
            self.w = jnp.pad(w, ((0, 0), (0, np_lane - dout)))
            self.b_row = jnp.pad(b_f32, ((0, 0), (0, np_lane - dout)))
            self.tn = np_lane
            self.tk = d
            # Size the M-tile cap so the (double-buffered) footprint fits.
            w_bytes = 2 * d * np_lane * witem + 2 * np_lane * 4
            tm_cap = max(_round_up(tm, self.mult), self.mult)
            while tm_cap > self.mult:
                foot = w_bytes + 2 * tm_cap * (d * witem + np_lane * 4)
                if foot <= _RESIDENT_VMEM_BUDGET:
                    break
                tm_cap //= 2
            self.tm_cap = max(_round_up(tm_cap, self.mult), self.mult)
        else:
            # Streaming schedule: tile K and N; pad the weight/bias ONCE here.
            self.tk = min(tk, _round_up(d, 128))
            self.tn = min(tn, np_lane)
            self.kp = _round_up(d, self.tk)
            self.np_pad = _round_up(dout, self.tn)
            self.w = jnp.pad(w, ((0, self.kp - d), (0, self.np_pad - dout)))
            self.b_row = jnp.pad(b_f32, ((0, 0), (0, self.np_pad - dout)))
            self.tm_cap = max(_round_up(tm, self.mult), self.mult)

    # -- public forward -----------------------------------------------------
    def __call__(self, x: jax.Array) -> jax.Array:
        if x.shape[-1] != self.d:
            raise ValueError(f"expected last dim {self.d}, got {x.shape[-1]}")
        lead = x.shape[:-1]
        out_dtype = x.dtype
        x2d = x.reshape((-1, x.shape[-1]))
        if self.compute_dtype is not None and x2d.dtype != self.compute_dtype:
            x2d = x2d.astype(self.compute_dtype)
        if self.resident:
            y2d = self._forward_resident(x2d, out_dtype)
        else:
            y2d = self._forward_streaming(x2d, out_dtype)
        return y2d.reshape(lead + (self.dout,))

    # -- weight-resident single-pass schedule -------------------------------
    def _forward_resident(self, x2d: jax.Array, out_dtype) -> jax.Array:
        M, D = x2d.shape
        Np = self.np_pad
        xitem = x2d.dtype.itemsize
        oitem = jnp.dtype(out_dtype).itemsize

        if M <= self.tm_cap:
            tm, Mp = M, M                      # full-M block, zero padding
        else:
            tm = _pick_tile_m(M, self.tm_cap, self.mult)
            Mp = _round_up(M, tm)
            if Mp != M:
                x2d = jnp.pad(x2d, ((0, Mp - M), (0, 0)))

        grid = (Mp // tm,)
        cost = pl.CostEstimate(
            flops=2 * Mp * D * Np, transcendentals=0,
            bytes_accessed=xitem * Mp * D + self.w.dtype.itemsize * D * Np
                           + 4 * Np + oitem * Mp * Np)
        footprint = (2 * D * Np * self.w.dtype.itemsize + 2 * Np * 4
                     + 2 * tm * D * xitem + 2 * tm * Np * oitem)

        out = pl.pallas_call(
            _linear_resident_kernel,
            out_shape=jax.ShapeDtypeStruct((Mp, Np), out_dtype),
            grid_spec=pltpu.PrefetchScalarGridSpec(
                num_scalar_prefetch=0,
                grid=grid,
                in_specs=[
                    pl.BlockSpec((tm, D), lambda i: (i, 0)),     # x row tile
                    pl.BlockSpec((D, Np), lambda i: (0, 0)),     # resident W
                    pl.BlockSpec((1, Np), lambda i: (0, 0)),     # resident bias
                ],
                out_specs=pl.BlockSpec((tm, Np), lambda i: (i, 0)),
            ),
            compiler_params=pltpu.CompilerParams(
                dimension_semantics=("parallel",),
                vmem_limit_bytes=_vmem_limit(footprint)),
            cost_estimate=cost,
        )(x2d, self.w, self.b_row)

        if Mp != M or Np != self.dout:
            out = out[:M, :self.dout]
        return out

    # -- streaming (tiled K) schedule ----------------------------------------
    def _forward_streaming(self, x2d: jax.Array, out_dtype) -> jax.Array:
        M, D = x2d.shape
        Kp, Np = self.kp, self.np_pad
        tn, tk = self.tn, self.tk
        xitem = x2d.dtype.itemsize
        witem = self.w.dtype.itemsize
        oitem = jnp.dtype(out_dtype).itemsize

        tm = _pick_tile_m(M, self.tm_cap, self.mult)
        Mp = _round_up(M, tm)
        if (Mp, Kp) != (M, D):
            x2d = jnp.pad(x2d, ((0, Mp - M), (0, Kp - D)))

        grid = (Mp // tm, Np // tn, Kp // tk)

        # Actual streaming traffic: x re-read per N tile, w re-read per M tile.
        cost = pl.CostEstimate(
            flops=2 * Mp * Kp * Np, transcendentals=0,
            bytes_accessed=xitem * Mp * Kp * (Np // tn)
                           + witem * Kp * Np * (Mp // tm)
                           + 4 * Np * (Mp // tm)
                           + oitem * Mp * Np)

        f32_out = jnp.dtype(out_dtype) == jnp.dtype(jnp.float32)
        kernel = _linear_stream_kernel_f32 if f32_out else _linear_stream_kernel_acc
        scratch = [] if f32_out else [pltpu.VMEM((tm, tn), jnp.float32)]
        footprint = (2 * tm * tk * xitem + 2 * tk * tn * witem + 2 * tn * 4
                     + 2 * tm * tn * oitem + (0 if f32_out else tm * tn * 4))

        out = pl.pallas_call(
            kernel,
            out_shape=jax.ShapeDtypeStruct((Mp, Np), out_dtype),
            grid_spec=pltpu.PrefetchScalarGridSpec(
                num_scalar_prefetch=0,
                grid=grid,
                in_specs=[
                    pl.BlockSpec((tm, tk), lambda i, j, k: (i, k)),  # x tile
                    pl.BlockSpec((tk, tn), lambda i, j, k: (k, j)),  # w tile
                    pl.BlockSpec((1, tn), lambda i, j, k: (0, j)),   # bias tile
                ],
                out_specs=pl.BlockSpec((tm, tn), lambda i, j, k: (i, j)),
                scratch_shapes=scratch,
            ),
            compiler_params=pltpu.CompilerParams(
                dimension_semantics=("parallel", "parallel", "arbitrary"),
                vmem_limit_bytes=_vmem_limit(footprint)),
            cost_estimate=cost,
        )(x2d, self.w, self.b_row)

        if (Mp, Np) != (M, self.dout):
            out = out[:M, :self.dout]
        return out


# ---------------------------------------------------------------------------
# bmap / Bmap (faithful JAX port of the PyTorch reference)
# ---------------------------------------------------------------------------
def bmap(module: Callable, *xs: jax.Array, axes: Axes = 1, **kwargs):
    if isinstance(axes, int):
        axes = (axes,)
    if 0 in axes:
        raise ValueError("Batch dimension (0) cannot be included in axes")
    N = len(xs[0].shape)
    axes = tuple((i if i > 0 else N + i) for i in axes)
    if len(set(tuple(x.shape) for x in xs)) > 1:
        msg = "; ".join(f"{tuple(x.shape)}" for x in xs)
        raise ValueError(f"Inputs have mismatched number of dimensions: {msg}")

    batch_axes = (0,) + tuple(sorted(axes))
    other_axes = tuple(i for i in range(N) if i not in batch_axes)
    permutation = batch_axes + other_axes
    inverse_permutation = tuple(np.argsort(permutation).tolist())

    original_shape = xs[0].shape
    batch_dim = int(np.prod([original_shape[d] for d in batch_axes]))
    batched_shape = (batch_dim,) + tuple(original_shape[d] for d in other_axes)
    batched_inputs = [
        jnp.transpose(x, permutation).reshape(batched_shape) for x in xs
    ]
    batched_output = module(*batched_inputs, **kwargs)

    def undo(y: jax.Array):
        unbatched_shape = tuple(original_shape[d] for d in batch_axes) + tuple(
            y.shape[1:])
        return jnp.transpose(y.reshape(unbatched_shape), inverse_permutation)

    if isinstance(batched_output, tuple):
        return tuple(map(undo, batched_output))
    return undo(batched_output)


class Bmap:
    """JAX counterpart of pylot.nn.bmap.Bmap."""

    def __init__(self, module: Callable, axes: Axes = 1):
        self.module = module
        self.axes = axes

    def __call__(self, x: jax.Array) -> jax.Array:
        axes = (self.axes,) if isinstance(self.axes, int) else tuple(self.axes)
        if 0 in axes:
            raise ValueError("Batch dimension (0) cannot be included in axes")
        N = x.ndim
        norm = tuple(a if a > 0 else N + a for a in axes)
        # Fast path: Linear only contracts the last axis; if the permutation
        # never touches the last axis, the permute/reshape round-trip is a
        # mathematical no-op -> skip the two HBM copy passes.
        if getattr(self.module, "contracts_last_dim_only", False) and (N - 1) not in norm:
            return self.module(x)
        return bmap(self.module, x, axes=self.axes)


# ---------------------------------------------------------------------------
# Demo / smoke test
# ---------------------------------------------------------------------------
if __name__ == "__main__":
    # Deliberately ragged shapes: M = B*C*H = 120, D = 200, DOUT = 320
    # -> exercises N padding, full-M resident blocks, multi-tile grids and the
    #    streaming K-accumulation path.
    B, C, H, D, DOUT = 2, 4, 15, 200, 320

    key = jax.random.PRNGKey(0)
    kx, kw, kb = jax.random.split(key, 3)

    # Deterministic "nn.Linear(D, DOUT)" parameters (PyTorch-style uniform init).
    bound = 1.0 / np.sqrt(D)
    w_pt = jax.random.uniform(kw, (DOUT, D), jnp.float32, -bound, bound)  # torch layout
    bias = jax.random.uniform(kb, (DOUT,), jnp.float32, -bound, bound)
    x = jax.random.normal(kx, (B, C, H, D), jnp.float32)

    # Pure-JAX reference for the same Bmap(Linear) forward.
    y_ref = jnp.einsum("bchd,od->bcho", x, w_pt,
                       precision=jax.lax.Precision.HIGHEST) + bias

    # 1) Production default: bf16 compute, weight-resident single-pass schedule,
    #    Bmap fast path (no transpose round-trip).
    model = Bmap(PallasLinear(w_pt, bias), axes=2)
    y = jax.block_until_ready(model(x))
    assert y.shape == (B, C, H, DOUT)
    np.testing.assert_allclose(np.asarray(y), np.asarray(y_ref), rtol=3e-2, atol=3e-2)

    # 2) Exact f32 compute path (compute_dtype=None), still weight-resident.
    model_f32 = Bmap(PallasLinear(w_pt, bias, compute_dtype=None), axes=2)
    y2 = jax.block_until_ready(model_f32(x))
    np.testing.assert_allclose(np.asarray(y2), np.asarray(y_ref), rtol=2e-4, atol=2e-4)

    # 3) Streaming (tiled K) schedule forced via weight_resident_max_bytes=0,
    #    f32 compute -> direct-output accumulation kernel, multi-tile M/N/K grid.
    model_stream = Bmap(PallasLinear(w_pt, bias, compute_dtype=None,
                                     weight_resident_max_bytes=0,
                                     tm=64, tn=128, tk=128), axes=2)
    y3 = jax.block_until_ready(model_stream(x))
    np.testing.assert_allclose(np.asarray(y3), np.asarray(y_ref), rtol=2e-4, atol=2e-4)

    # 4) Streaming schedule with bf16 compute (scratchless f32-out kernel).
    model_stream_bf16 = Bmap(PallasLinear(w_pt, bias,
                                          weight_resident_max_bytes=0,
                                          tm=64, tn=128, tk=128), axes=2)
    y4 = jax.block_until_ready(model_stream_bf16(x))
    np.testing.assert_allclose(np.asarray(y4), np.asarray(y_ref), rtol=3e-2, atol=3e-2)

    # 5) General (non-fast-path) bmap fallback matches as well.
    y5 = jax.block_until_ready(bmap(PallasLinear(w_pt, bias), x, axes=2))
    np.testing.assert_allclose(np.asarray(y5), np.asarray(y_ref), rtol=3e-2, atol=3e-2)

    print("KERNEL_OK")
</pallas_src>

<mosaic_0001>
module attributes {stable_mosaic.version = 11 : i64} {
  func.func @_linear_resident_kernel(%arg0: i32, %arg1: memref<120x200xbf16, #tpu.memory_space<vmem>>, %arg2: memref<200x384xbf16, #tpu.memory_space<vmem>>, %arg3: memref<1x384xf32, #tpu.memory_space<vmem>>, %arg4: memref<120x384xf32, #tpu.memory_space<vmem>>) attributes {dimension_semantics = [#tpu.dimension_semantics<parallel>], iteration_bounds = array<i64: 1>, scalar_prefetch = 0 : i64, scratch_operands = 0 : i64, tpu.core_type = #tpu.core_type<tc>, window_params = [{transform_indices = @transform_0, window_bounds = array<i64: 120, 200>}, {pipeline_mode = #tpu.pipeline_mode<synchronous>, transform_indices = @transform_1, window_bounds = array<i64: 200, 384>}, {pipeline_mode = #tpu.pipeline_mode<synchronous>, transform_indices = @transform_2, window_bounds = array<i64: 1, 384>}, {transform_indices = @transform_3, window_bounds = array<i64: 120, 384>}]} {
    %c0 = arith.constant 0 : index
    %c0_0 = arith.constant 0 : index
    %0 = vector.load %arg1[%c0, %c0_0] : memref<120x200xbf16, #tpu.memory_space<vmem>>, vector<120x200xbf16>
    %c0_1 = arith.constant 0 : index
    %c0_2 = arith.constant 0 : index
    %1 = vector.load %arg2[%c0_1, %c0_2] : memref<200x384xbf16, #tpu.memory_space<vmem>>, vector<200x384xbf16>
    %cst = arith.constant dense<0.000000e+00> : vector<120x384xf32>
    %2 = tpu.matmul %0, %1, %cst {dimension_numbers = #tpu.dot_dimension_numbers<[1], [0], [0], [1], [0, 0, 1, 1], [], []>} : vector<120x200xbf16>, vector<200x384xbf16>, vector<120x384xf32> -> vector<120x384xf32>
    %c0_3 = arith.constant 0 : index
    %c0_4 = arith.constant 0 : index
    %3 = vector.load %arg3[%c0_3, %c0_4] : memref<1x384xf32, #tpu.memory_space<vmem>>, vector<1x384xf32>
    %4 = vector.broadcast %3 : vector<1x384xf32> to vector<120x384xf32>
    %5 = arith.addf %2, %4 : vector<120x384xf32>
    %c0_5 = arith.constant 0 : index
    %c0_6 = arith.constant 0 : index
    %6 = vector.load %arg4[%c0_5, %c0_6] : memref<120x384xf32, #tpu.memory_space<vmem>>, vector<120x384xf32>
    tpu.vector_store %arg4[%c0_5, %c0_6], %5 {strides = array<i32>} : memref<120x384xf32, #tpu.memory_space<vmem>>, vector<120x384xf32>,
    return
  }
  func.func @transform_0(%arg0: i32) -> (i32, i32) {
    %c0_i32 = arith.constant 0 : i32
    %c0_i32_0 = arith.constant 0 : i32
    return %arg0, %c0_i32 : i32, i32
  }
  func.func @transform_1(%arg0: i32) -> (i32, i32) {
    %c0_i32 = arith.constant 0 : i32
    %c0_i32_0 = arith.constant 0 : i32
    %c0_i32_1 = arith.constant 0 : i32
    return %c0_i32, %c0_i32_0 : i32, i32
  }
  func.func @transform_2(%arg0: i32) -> (i32, i32) {
    %c0_i32 = arith.constant 0 : i32
    %c0_i32_0 = arith.constant 0 : i32
    %c0_i32_1 = arith.constant 0 : i32
    return %c0_i32, %c0_i32_0 : i32, i32
  }
  func.func @transform_3(%arg0: i32) -> (i32, i32) {
    %c0_i32 = arith.constant 0 : i32
    %c0_i32_0 = arith.constant 0 : i32
    return %arg0, %c0_i32 : i32, i32
  }
}

</mosaic_0001>

<llo_original>
// kernel: tpu_custom_call.1
$region0: #{tpu_custom_call.1}
  #allocation0 [shape = 'u32[]', space=smem, size = 0x4, offset = 0x4, fixed_abs, tag = 'smem constant byte address 0x4 - core index']
  #allocation1 [shape = 'u32[144,128]{1,0:T(1,128)}', space=vmem, size = 0x12000, scoped, tag = 'internal scratch']
  %s0 = inlined_call_operand.vmem [shape: bf16[120,200], index: 0, kind: input, shape index: {}]
  %s1 = inlined_call_operand.hbm [shape: bf16[200,384], index: 1, kind: input, shape index: {}]
  %s2 = inlined_call_operand.vmem [shape: f32[1,384], index: 2, kind: input, shape index: {}]
  %s3 = inlined_call_operand.hbm [shape: f32[120,384], index: 3, kind: output, shape index: {}]
  %s4 = sld [smem:[#allocation0]]
  $region26: #{tpu_custom_call.1} parent=0
    _
  %s6 = ssub.s32 1, %s4
  %s7 = scalar_select 0, %s6, %s4
  $region1: #{tpu_custom_call.1} parent=0
    #allocation2 [shape = 'u8[153600]{0}', space=vmem, size = 0x25800, scoped, tag = 'input window, operand 1, single buffered']
    #allocation3 [shape = 's32[1]{0}', space=sflag, size = 0x4, scoped, tag = 'scoped memory for tpu_custom_call.1']
    #allocation4 [shape = 's32[1]{0}', space=sflag, size = 0x4, scoped, tag = 'scoped memory for tpu_custom_call.1']
    #allocation5 [shape = 'u8[184320]{0}', space=vmem, size = 0x2d000, scoped, tag = 'output window, operand 0, single buffered']
    %8 = vsyncpa [#allocation3], 0
    %9 = vsyncpa [#allocation4], 0
    // Predicated region
    $region2: #{tpu_custom_call.1} parent=1 // pred_check
      _
    $region3: #{tpu_custom_call.1} parent=1 // pred_check_branch
      %11 = sbr.rel (0) target = $region5
    $region4: #{tpu_custom_call.1} parent=1 // pred_region
      _
    $region5: #{tpu_custom_call.1} parent=1 // pred_fallthru
      _
    // Predicated region
    $region6: #{tpu_custom_call.1} parent=1 // pred_check
      _
    $region7: #{tpu_custom_call.1} parent=1 // pred_check_branch
      %13 = sbr.rel (0) target = $region9
    $region8: #{tpu_custom_call.1} parent=1 // pred_region
      %s15 = ssub.s32 4800, 4800
      %16 = vsyncadd [#allocation3], %s15
      %s17 = sshll.u32 [#allocation2], 4
      %s18 = int_to_ptr.vmem [resolvable:$true] %s17
      %23 = dma.hbm_to_vmem [thread:$0]  %s1, 4800, %s18, [#allocation3], 192, 192, 12
    $region9: #{tpu_custom_call.1} parent=1 // pred_fallthru
      _
    // Predicated region
    $region10: #{tpu_custom_call.1} parent=1 // pred_check
      _
    $region11: #{tpu_custom_call.1} parent=1 // pred_check_branch
      %25 = sbr.rel (0) target = $region13
    $region12: #{tpu_custom_call.1} parent=1 // pred_region
      _
    $region13: #{tpu_custom_call.1} parent=1 // pred_fallthru
      _
    // Predicated region
    $region14: #{tpu_custom_call.1} parent=1 // pred_check
      _
    $region15: #{tpu_custom_call.1} parent=1 // pred_check_branch
      %27 = sbr.rel (0) target = $region17
    $region16: #{tpu_custom_call.1} parent=1 // pred_region
      %28 = dma.done [#allocation3], 4800
    $region17: #{tpu_custom_call.1} parent=1 // pred_fallthru
      _
    %v30 = vld [vmem:[%s0] sm:$0xff]
    %v31 = vld [vmem:[%s0 + $0x8] sm:$0xff]
    %v32 = vld [vmem:[%s0 + $0x10] sm:$0xff]
    %v33 = vld [vmem:[%s0 + $0x18] sm:$0xff]
    %v34 = vld [vmem:[%s0 + $0x20] sm:$0xff]
    %v35 = vld [vmem:[%s0 + $0x28] sm:$0xff]
    %v36 = vld [vmem:[%s0 + $0x30] sm:$0xff]
    %v37 = vld [vmem:[%s0 + $0x38] sm:$0xff]
    %v38 = vld [vmem:[%s0 + $0x40] sm:$0xff]
    %v39 = vld [vmem:[%s0 + $0x48] sm:$0xff]
    %v40 = vld [vmem:[%s0 + $0x50] sm:$0xff]
    %v41 = vld [vmem:[%s0 + $0x58] sm:$0xff]
    %v42 = vld [vmem:[%s0 + $0x60] sm:$0xff]
    %v43 = vld [vmem:[%s0 + $0x68] sm:$0xff]
    %v44 = vld [vmem:[%s0 + $0x70] sm:$0xff]
    %v45 = vld [vmem:[#allocation2] sm:$0xff]
    %v46 = vld [vmem:[#allocation2 + $0x8] sm:$0xf]
    %v47 = vld [vmem:[#allocation2 + $0xc] sm:$0xff]
    %v48 = vld [vmem:[#allocation2 + $0x14] sm:$0xf]
    %v49 = vld [vmem:[#allocation2 + $0x18] sm:$0xff]
    %v50 = vld [vmem:[#allocation2 + $0x20] sm:$0xf]
    %v51 = vld [vmem:[#allocation2 + $0x24] sm:$0xff]
    %v52 = vld [vmem:[#allocation2 + $0x2c] sm:$0xf]
    %v53 = vld [vmem:[#allocation2 + $0x30] sm:$0xff]
    %v54 = vld [vmem:[#allocation2 + $0x38] sm:$0xf]
    %v55 = vld [vmem:[#allocation2 + $0x3c] sm:$0xff]
    %v56 = vld [vmem:[#allocation2 + $0x44] sm:$0xf]
    %v57 = vld [vmem:[#allocation2 + $0x48] sm:$0xff]
    %v58 = vld [vmem:[#allocation2 + $0x50] sm:$0xf]
    %v59 = vld [vmem:[#allocation2 + $0x54] sm:$0xff]
    %v60 = vld [vmem:[#allocation2 + $0x5c] sm:$0xf]
    %v61 = vld [vmem:[#allocation2 + $0x60] sm:$0xff]
    %v62 = vld [vmem:[#allocation2 + $0x68] sm:$0xf]
    %v63 = vld [vmem:[#allocation2 + $0x6c] sm:$0xff]
    %v64 = vld [vmem:[#allocation2 + $0x74] sm:$0xf]
    %v65 = vld [vmem:[#allocation2 + $0x78] sm:$0xff]
    %v66 = vld [vmem:[#allocation2 + $0x80] sm:$0xf]
    %v67 = vld [vmem:[#allocation2 + $0x84] sm:$0xff]
    %v68 = vld [vmem:[#allocation2 + $0x8c] sm:$0xf]
    %v69 = vld [vmem:[#allocation2 + $0x90] sm:$0xff]
    %v70 = vld [vmem:[#allocation2 + $0x98] sm:$0xf]
    %v71 = vld [vmem:[#allocation2 + $0x9c] sm:$0xff]
    %v72 = vld [vmem:[#allocation2 + $0xa4] sm:$0xf]
    %v73 = vld [vmem:[#allocation2 + $0xa8] sm:$0xff]
    %v74 = vld [vmem:[#allocation2 + $0xb0] sm:$0xf]
    %v75 = vld [vmem:[#allocation2 + $0xb4] sm:$0xff]
    %v76 = vld [vmem:[#allocation2 + $0xbc] sm:$0xf]
    %v77 = vld [vmem:[#allocation2 + $0xc0] sm:$0xff]
    %v78 = vld [vmem:[#allocation2 + $0xc8] sm:$0xf]
    %v79 = vld [vmem:[#allocation2 + $0xcc] sm:$0xff]
    %v80 = vld [vmem:[#allocation2 + $0xd4] sm:$0xf]
    %v81 = vld [vmem:[#allocation2 + $0xd8] sm:$0xff]
    %v82 = vld [vmem:[#allocation2 + $0xe0] sm:$0xf]
    %v83 = vld [vmem:[#allocation2 + $0xe4] sm:$0xff]
    %v84 = vld [vmem:[#allocation2 + $0xec] sm:$0xf]
    %v85 = vld [vmem:[#allocation2 + $0xf0] sm:$0xff]
    %v86 = vld [vmem:[#allocation2 + $0xf8] sm:$0xf]
    %v87 = vld [vmem:[#allocation2 + $0xfc] sm:$0xff]
    %v88 = vld [vmem:[#allocation2 + $0x104] sm:$0xf]
    %v89 = vld [vmem:[#allocation2 + $0x108] sm:$0xff]
    %v90 = vld [vmem:[#allocation2 + $0x110] sm:$0xf]
    %v91 = vld [vmem:[#allocation2 + $0x114] sm:$0xff]
    %v92 = vld [vmem:[#allocation2 + $0x11c] sm:$0xf]
    %v93 = vld [vmem:[#allocation2 + $0x120] sm:$0xff]
    %v94 = vld [vmem:[#allocation2 + $0x128] sm:$0xf]
    %v95 = vld [vmem:[%s2] sm:$0x7]
    %v97 = vlaneseq
    %v98 = vshrl.u32 %v97, 7
    %v99 = vsub.s32 0, %v98
    %v100 = vrot.slane %v95, %v99
    %v101 = vlaneseq
    %v102 = vshrl.u32 %v101, 7
    %v103 = vsub.s32 1, %v102
    %v104 = vrot.slane %v95, %v103
    %v105 = vlaneseq
    %v106 = vshrl.u32 %v105, 7
    %v107 = vsub.s32 2, %v106
    %v108 = vrot.slane %v95, %v107
    %v127 = vunpack.c.l.b16 %v30
    %v128 = vunpack.c.h.b16 %v30
    %v129 = vunpack.c.l.b16 %v31
    %v130 = vunpack.c.h.b16 %v31
    %v131 = vunpack.c.l.b16 %v32
    %v132 = vunpack.c.h.b16 %v32
    %v133 = vunpack.c.l.b16 %v33
    %v134 = vunpack.c.h.b16 %v33
    %v135 = vunpack.c.l.b16 %v34
    %v136 = vunpack.c.h.b16 %v34
    %v137 = vunpack.c.l.b16 %v35
    %v138 = vunpack.c.h.b16 %v35
    %v139 = vunpack.c.l.b16 %v36
    %v140 = vunpack.c.h.b16 %v36
    %v141 = vunpack.c.l.b16 %v37
    %v142 = vunpack.c.h.b16 %v37
    %v143 = vunpack.c.l.b16 %v38
    %v144 = vunpack.c.h.b16 %v38
    %v145 = vunpack.c.l.b16 %v39
    %v146 = vunpack.c.h.b16 %v39
    %v147 = vunpack.c.l.b16 %v40
    %v148 = vunpack.c.h.b16 %v40
    %v149 = vunpack.c.l.b16 %v41
    %v150 = vunpack.c.h.b16 %v41
    %v151 = vunpack.c.l.b16 %v42
    %v152 = vunpack.c.h.b16 %v42
    %v153 = vunpack.c.l.b16 %v43
    %v154 = vunpack.c.h.b16 %v43
    %v155 = vunpack.c.l.b16 %v44
    %v156 = vunpack.c.h.b16 %v44
    %v157 = vpack.c.b16 %v129, %v127
    %v158 = vpack.c.b16 %v130, %v128
    %v159 = vpack.c.b16 %v133, %v131
    %v160 = vpack.c.b16 %v134, %v132
    %v161 = vpack.c.b16 %v137, %v135
    %v162 = vpack.c.b16 %v138, %v136
    %v163 = vpack.c.b16 %v141, %v139
    %v164 = vpack.c.b16 %v142, %v140
    %v165 = vpack.c.b16 %v145, %v143
    %v166 = vpack.c.b16 %v146, %v144
    %v167 = vpack.c.b16 %v149, %v147
    %v168 = vpack.c.b16 %v150, %v148
    %v169 = vpack.c.b16 %v153, %v151
    %v170 = vpack.c.b16 %v154, %v152
    %v171 = vpack.c.b16 %v155, %v155
    %v172 = vpack.c.b16 %v156, %v156
    %v231 = vunpack.c.l.b16 %v45
    %v232 = vunpack.c.h.b16 %v45
    %v233 = vunpack.c.l.b16 %v46
    %v234 = vunpack.c.l.b16 %v47
    %v235 = vunpack.c.h.b16 %v47
    %v236 = vunpack.c.l.b16 %v48
    %v237 = vunpack.c.l.b16 %v49
    %v238 = vunpack.c.h.b16 %v49
    %v239 = vunpack.c.l.b16 %v50
    %v240 = vunpack.c.l.b16 %v51
    %v241 = vunpack.c.h.b16 %v51
    %v242 = vunpack.c.l.b16 %v52
    %v243 = vunpack.c.l.b16 %v53
    %v244 = vunpack.c.h.b16 %v53
    %v245 = vunpack.c.l.b16 %v54
    %v246 = vunpack.c.l.b16 %v55
    %v247 = vunpack.c.h.b16 %v55
    %v248 = vunpack.c.l.b16 %v56
    %v249 = vunpack.c.l.b16 %v57
    %v250 = vunpack.c.h.b16 %v57
    %v251 = vunpack.c.l.b16 %v58
    %v252 = vunpack.c.l.b16 %v59
    %v253 = vunpack.c.h.b16 %v59
    %v254 = vunpack.c.l.b16 %v60
    %v255 = vunpack.c.l.b16 %v61
    %v256 = vunpack.c.h.b16 %v61
    %v257 = vunpack.c.l.b16 %v62
    %v258 = vunpack.c.l.b16 %v63
    %v259 = vunpack.c.h.b16 %v63
    %v260 = vunpack.c.l.b16 %v64
    %v261 = vunpack.c.l.b16 %v65
    %v262 = vunpack.c.h.b16 %v65
    %v263 = vunpack.c.l.b16 %v66
    %v264 = vunpack.c.l.b16 %v67
    %v265 = vunpack.c.h.b16 %v67
    %v266 = vunpack.c.l.b16 %v68
    %v267 = vunpack.c.l.b16 %v69
    %v268 = vunpack.c.h.b16 %v69
    %v269 = vunpack.c.l.b16 %v70
    %v270 = vunpack.c.l.b16 %v71
    %v271 = vunpack.c.h.b16 %v71
    %v272 = vunpack.c.l.b16 %v72
    %v273 = vunpack.c.l.b16 %v73
    %v274 = vunpack.c.h.b16 %v73
    %v275 = vunpack.c.l.b16 %v74
    %v276 = vunpack.c.l.b16 %v75
    %v277 = vunpack.c.h.b16 %v75
    %v278 = vunpack.c.l.b16 %v76
    %v279 = vunpack.c.l.b16 %v77
    %v280 = vunpack.c.h.b16 %v77
    %v281 = vunpack.c.l.b16 %v78
    %v282 = vunpack.c.l.b16 %v79
    %v283 = vunpack.c.h.b16 %v79
    %v284 = vunpack.c.l.b16 %v80
    %v285 = vunpack.c.l.b16 %v81
    %v286 = vunpack.c.h.b16 %v81
    %v287 = vunpack.c.l.b16 %v82
    %v288 = vunpack.c.l.b16 %v83
    %v289 = vunpack.c.h.b16 %v83
    %v290 = vunpack.c.l.b16 %v84
    %v291 = vunpack.c.l.b16 %v85
    %v292 = vunpack.c.h.b16 %v85
    %v293 = vunpack.c.l.b16 %v86
    %v294 = vunpack.c.l.b16 %v87
    %v295 = vunpack.c.h.b16 %v87
    %v296 = vunpack.c.l.b16 %v88
    %v297 = vunpack.c.l.b16 %v89
    %v298 = vunpack.c.h.b16 %v89
    %v299 = vunpack.c.l.b16 %v90
    %v300 = vunpack.c.l.b16 %v91
    %v301 = vunpack.c.h.b16 %v91
    %v302 = vunpack.c.l.b16 %v92
    %v303 = vunpack.c.l.b16 %v93
    %v304 = vunpack.c.h.b16 %v93
    %v305 = vunpack.c.l.b16 %v94
    %v306 = vpack.c.b16 %v234, %v231
    %v307 = vpack.c.b16 %v235, %v232
    %v308 = vpack.c.b16 %v236, %v233
    %v309 = vpack.c.b16 %v240, %v237
    %v310 = vpack.c.b16 %v241, %v238
    %v311 = vpack.c.b16 %v242, %v239
    %v312 = vpack.c.b16 %v246, %v243
    %v313 = vpack.c.b16 %v247, %v244
    %v314 = vpack.c.b16 %v248, %v245
    %v315 = vpack.c.b16 %v252, %v249
    %v316 = vpack.c.b16 %v253, %v250
    %v317 = vpack.c.b16 %v254, %v251
    %v318 = vpack.c.b16 %v258, %v255
    %v319 = vpack.c.b16 %v259, %v256
    %v320 = vpack.c.b16 %v260, %v257
    %v321 = vpack.c.b16 %v264, %v261
    %v322 = vpack.c.b16 %v265, %v262
    %v323 = vpack.c.b16 %v266, %v263
    %v324 = vpack.c.b16 %v270, %v267
    %v325 = vpack.c.b16 %v271, %v268
    %v326 = vpack.c.b16 %v272, %v269
    %v327 = vpack.c.b16 %v276, %v273
    %v328 = vpack.c.b16 %v277, %v274
    %v329 = vpack.c.b16 %v278, %v275
    %v330 = vpack.c.b16 %v282, %v279
    %v331 = vpack.c.b16 %v283, %v280
    %v332 = vpack.c.b16 %v284, %v281
    %v333 = vpack.c.b16 %v288, %v285
    %v334 = vpack.c.b16 %v289, %v286
    %v335 = vpack.c.b16 %v290, %v287
    %v336 = vpack.c.b16 %v294, %v291
    %v337 = vpack.c.b16 %v295, %v292
    %v338 = vpack.c.b16 %v296, %v293
    %v339 = vpack.c.b16 %v300, %v297
    %v340 = vpack.c.b16 %v301, %v298
    %v341 = vpack.c.b16 %v302, %v299
    %v342 = vpack.c.b16 %v303, %v303
    %v343 = vpack.c.b16 %v304, %v304
    %v344 = vpack.c.b16 %v305, %v305
    %vm381 = vcmask 588800
    %v383 = vsel %vm381, %v158, 0
    %v386 = vsel %vm381, %v160, 0
    %v389 = vsel %vm381, %v162, 0
    %v392 = vsel %vm381, %v164, 0
    %v395 = vsel %vm381, %v166, 0
    %v398 = vsel %vm381, %v168, 0
    %v401 = vsel %vm381, %v170, 0
    %v404 = vsel %vm381, %v172, 0
    %vm406 = vcmask 1043456
    %v408 = vsel %vm406, %v342, 0
    %v411 = vsel %vm406, %v343, 0
    %v414 = vsel %vm406, %v344, 0
    %416 = vmatprep.subr.bf16.mxu0 %v307
    %417 = vmatpush1.bf16.msra.mxu0 %v306
    %418 = vmatprep.subr.bf16.mxu0 %v310
    %419 = vmatpush1.bf16.msra.mxu0 %v309
    %420 = vmatprep.subr.bf16.mxu0 %v313
    %421 = vmatpush1.bf16.msra.mxu0 %v312
    %422 = vmatprep.subr.bf16.mxu0 %v316
    %423 = vmatpush1.bf16.msra.mxu0 %v315
    %424 = vmatprep.subr.bf16.mxu0 %v319
    %425 = vmatpush1.bf16.msra.mxu0 %v318
    %426 = vmatprep.subr.bf16.mxu0 %v322
    %427 = vmatpush1.bf16.msra.mxu0 %v321
    %428 = vmatprep.subr.bf16.mxu0 %v325
    %429 = vmatpush1.bf16.msra.mxu0 %v324
    %430 = vmatprep.subr.bf16.mxu0 %v328
    %431 = vmatpush1.bf16.msra.mxu0 %v327
    %432 = vmatprep.subr.bf16.mxu0 %v331
    %433 = vmatpush1.bf16.msra.mxu0 %v330
    %434 = vmatprep.subr.bf16.mxu0 %v334
    %435 = vmatpush1.bf16.msra.mxu0 %v333
    %436 = vmatprep.subr.bf16.mxu0 %v337
    %437 = vmatpush1.bf16.msra.mxu0 %v336
    %438 = vmatprep.subr.bf16.mxu0 %v340
    %439 = vmatpush1.bf16.msra.mxu0 %v339
    %440 = vmatprep.subr.bf16.mxu0 %v411
    %441 = vmatpush1.bf16.msra.mxu0 %v408
    %442 = vmatprep.subr.bf16.mxu0 0
    %443 = vmatpush1.bf16.msra.mxu0 0
    %444 = vmatprep.subr.bf16.mxu0 0
    %445 = vmatpush1.bf16.msra.mxu0 0
    %446 = vmatprep.subr.bf16.mxu0 0
    %447 = vmatpush1.bf16.msra.mxu0 0
    %448 = vmatprep.mubr.bf16.mxu0 %v383
    %449 = vmatmul.mubr.bf16.gmra.mrb[0].mxu0 %v157
    %v450 = vpop.f32.mrb[0].mxu0
    %v451 = vadd.f32 %v100, %v450
    %v452 = vpop.f32.mrb[0].mxu0
    %v453 = vadd.f32 %v104, %v452
    %v454 = vpop.f32.mrb[0].mxu0
    %v455 = vadd.f32 %v100, %v454
    %v456 = vpop.f32.mrb[0].mxu0
    %v457 = vadd.f32 %v104, %v456
    %458 = vmatprep.mubr.bf16.mxu0 %v386
    %459 = vmatmul.mubr.bf16.gmra.mrb[0].mxu0 %v159
    %v460 = vpop.f32.mrb[0].mxu0
    %v461 = vadd.f32 %v100, %v460
    %v462 = vpop.f32.mrb[0].mxu0
    %v463 = vadd.f32 %v104, %v462
    %v464 = vpop.f32.mrb[0].mxu0
    %v465 = vadd.f32 %v100, %v464
    %v466 = vpop.f32.mrb[0].mxu0
    %v467 = vadd.f32 %v104, %v466
    %468 = vmatprep.mubr.bf16.mxu0 %v389
    %469 = vmatmul.mubr.bf16.gmra.mrb[0].mxu0 %v161
    %v470 = vpop.f32.mrb[0].mxu0
    %v471 = vadd.f32 %v100, %v470
    %v472 = vpop.f32.mrb[0].mxu0
    %v473 = vadd.f32 %v104, %v472
    %v474 = vpop.f32.mrb[0].mxu0
    %v475 = vadd.f32 %v100, %v474
    %v476 = vpop.f32.mrb[0].mxu0
    %v477 = vadd.f32 %v104, %v476
    %478 = vmatprep.mubr.bf16.mxu0 %v392
    %479 = vmatmul.mubr.bf16.gmra.mrb[0].mxu0 %v163
    %v480 = vpop.f32.mrb[0].mxu0
    %v481 = vadd.f32 %v100, %v480
    %v482 = vpop.f32.mrb[0].mxu0
    %v483 = vadd.f32 %v104, %v482
    %v484 = vpop.f32.mrb[0].mxu0
    %v485 = vadd.f32 %v100, %v484
    %v486 = vpop.f32.mrb[0].mxu0
    %v487 = vadd.f32 %v104, %v486
    %488 = vmatprep.mubr.bf16.mxu0 %v395
    %489 = vmatmul.mubr.bf16.gmra.mrb[0].mxu0 %v165
    %v490 = vpop.f32.mrb[0].mxu0
    %v491 = vadd.f32 %v100, %v490
    %v492 = vpop.f32.mrb[0].mxu0
    %v493 = vadd.f32 %v104, %v492
    %v494 = vpop.f32.mrb[0].mxu0
    %v495 = vadd.f32 %v100, %v494
    %v496 = vpop.f32.mrb[0].mxu0
    %v497 = vadd.f32 %v104, %v496
    %498 = vmatprep.mubr.bf16.mxu0 %v398
    %499 = vmatmul.mubr.bf16.gmra.mrb[0].mxu0 %v167
    %v500 = vpop.f32.mrb[0].mxu0
    %v501 = vadd.f32 %v100, %v500
    %v502 = vpop.f32.mrb[0].mxu0
    %v503 = vadd.f32 %v104, %v502
    %v504 = vpop.f32.mrb[0].mxu0
    %v505 = vadd.f32 %v100, %v504
    %v506 = vpop.f32.mrb[0].mxu0
    %v507 = vadd.f32 %v104, %v506
    %508 = vmatprep.mubr.bf16.mxu0 %v401
    %509 = vmatmul.mubr.bf16.gmra.mrb[0].mxu0 %v169
    %v510 = vpop.f32.mrb[0].mxu0
    %v511 = vadd.f32 %v100, %v510
    %v512 = vpop.f32.mrb[0].mxu0
    %v513 = vadd.f32 %v104, %v512
    %v514 = vpop.f32.mrb[0].mxu0
    %v515 = vadd.f32 %v100, %v514
    %v516 = vpop.f32.mrb[0].mxu0
    %v517 = vadd.f32 %v104, %v516
    %518 = vmatprep.mubr.bf16.mxu0 %v404
    %519 = vmatmul.mubr.bf16.gmra.mrb[0].mxu0 %v171
    %v520 = vpop.f32.mrb[0].mxu0
    %v521 = vadd.f32 %v100, %v520
    %v522 = vpop.f32.mrb[0].mxu0
    %v523 = vadd.f32 %v104, %v522
    %v524 = vpop.f32.mrb[0].mxu0
    %v525 = vpop.f32.mrb[0].mxu0
    %526 = vdwg.mxu0
    %527 = vmatprep.subr.bf16.mxu0 0
    %528 = vmatpush1.bf16.msra.mxu0 %v308
    %529 = vmatprep.subr.bf16.mxu0 0
    %530 = vmatpush1.bf16.msra.mxu0 %v311
    %531 = vmatprep.subr.bf16.mxu0 0
    %532 = vmatpush1.bf16.msra.mxu0 %v314
    %533 = vmatprep.subr.bf16.mxu0 0
    %534 = vmatpush1.bf16.msra.mxu0 %v317
    %535 = vmatprep.subr.bf16.mxu0 0
    %536 = vmatpush1.bf16.msra.mxu0 %v320
    %537 = vmatprep.subr.bf16.mxu0 0
    %538 = vmatpush1.bf16.msra.mxu0 %v323
    %539 = vmatprep.subr.bf16.mxu0 0
    %540 = vmatpush1.bf16.msra.mxu0 %v326
    %541 = vmatprep.subr.bf16.mxu0 0
    %542 = vmatpush1.bf16.msra.mxu0 %v329
    %543 = vmatprep.subr.bf16.mxu0 0
    %544 = vmatpush1.bf16.msra.mxu0 %v332
    %545 = vmatprep.subr.bf16.mxu0 0
    %546 = vmatpush1.bf16.msra.mxu0 %v335
    %547 = vmatprep.subr.bf16.mxu0 0
    %548 = vmatpush1.bf16.msra.mxu0 %v338
    %549 = vmatprep.subr.bf16.mxu0 0
    %550 = vmatpush1.bf16.msra.mxu0 %v341
    %551 = vmatprep.subr.bf16.mxu0 0
    %552 = vmatpush1.bf16.msra.mxu0 %v414
    %553 = vmatprep.subr.bf16.mxu0 0
    %554 = vmatpush1.bf16.msra.mxu0 0
    %555 = vmatprep.subr.bf16.mxu0 0
    %556 = vmatpush1.bf16.msra.mxu0 0
    %557 = vmatprep.subr.bf16.mxu0 0
    %558 = vmatpush1.bf16.msra.mxu0 0
    %559 = vmatprep.mubr.bf16.mxu0 %v383
    %560 = vmatmul.mubr.bf16.gmra.mrb[0].mxu0 %v157
    %v561 = vpop.f32.mrb[0].mxu0
    %v562 = vadd.f32 %v108, %v561
    %v563 = vpop.f32.mrb[0].mxu0
    %v564 = vpop.f32.mrb[0].mxu0
    %v565 = vadd.f32 %v108, %v564
    %v566 = vpop.f32.mrb[0].mxu0
    %567 = vmatprep.mubr.bf16.mxu0 %v386
    %568 = vmatmul.mubr.bf16.gmra.mrb[0].mxu0 %v159
    %v569 = vpop.f32.mrb[0].mxu0
    %v570 = vadd.f32 %v108, %v569
    %v571 = vpop.f32.mrb[0].mxu0
    %v572 = vpop.f32.mrb[0].mxu0
    %v573 = vadd.f32 %v108, %v572
    %v574 = vpop.f32.mrb[0].mxu0
    %575 = vmatprep.mubr.bf16.mxu0 %v389
    %576 = vmatmul.mubr.bf16.gmra.mrb[0].mxu0 %v161
    %v577 = vpop.f32.mrb[0].mxu0
    %v578 = vadd.f32 %v108, %v577
    %v579 = vpop.f32.mrb[0].mxu0
    %v580 = vpop.f32.mrb[0].mxu0
    %v581 = vadd.f32 %v108, %v580
    %v582 = vpop.f32.mrb[0].mxu0
    %583 = vmatprep.mubr.bf16.mxu0 %v392
    %584 = vmatmul.mubr.bf16.gmra.mrb[0].mxu0 %v163
    %v585 = vpop.f32.mrb[0].mxu0
    %v586 = vadd.f32 %v108, %v585
    %v587 = vpop.f32.mrb[0].mxu0
    %v588 = vpop.f32.mrb[0].mxu0
    %v589 = vadd.f32 %v108, %v588
    %v590 = vpop.f32.mrb[0].mxu0
    %591 = vmatprep.mubr.bf16.mxu0 %v395
    %592 = vmatmul.mubr.bf16.gmra.mrb[0].mxu0 %v165
    %v593 = vpop.f32.mrb[0].mxu0
    %v594 = vadd.f32 %v108, %v593
    %v595 = vpop.f32.mrb[0].mxu0
    %v596 = vpop.f32.mrb[0].mxu0
    %v597 = vadd.f32 %v108, %v596
    %v598 = vpop.f32.mrb[0].mxu0
    %599 = vmatprep.mubr.bf16.mxu0 %v398
    %600 = vmatmul.mubr.bf16.gmra.mrb[0].mxu0 %v167
    %v601 = vpop.f32.mrb[0].mxu0
    %v602 = vadd.f32 %v108, %v601
    %v603 = vpop.f32.mrb[0].mxu0
    %v604 = vpop.f32.mrb[0].mxu0
    %v605 = vadd.f32 %v108, %v604
    %v606 = vpop.f32.mrb[0].mxu0
    %607 = vmatprep.mubr.bf16.mxu0 %v401
    %608 = vmatmul.mubr.bf16.gmra.mrb[0].mxu0 %v169
    %v609 = vpop.f32.mrb[0].mxu0
    %v610 = vadd.f32 %v108, %v609
    %v611 = vpop.f32.mrb[0].mxu0
    %v612 = vpop.f32.mrb[0].mxu0
    %v613 = vadd.f32 %v108, %v612
    %v614 = vpop.f32.mrb[0].mxu0
    %615 = vmatprep.mubr.bf16.mxu0 %v404
    %616 = vmatmul.mubr.bf16.gmra.mrb[0].mxu0 %v171
    %v617 = vpop.f32.mrb[0].mxu0
    %v618 = vadd.f32 %v108, %v617
    %v619 = vpop.f32.mrb[0].mxu0
    %v620 = vpop.f32.mrb[0].mxu0
    %v621 = vpop.f32.mrb[0].mxu0
    %622 = vdwg.mxu0
    %623 = vst [vmem:[#allocation5] sm:$0xff] %v451
    %624 = vst [vmem:[#allocation5 + $0x8] sm:$0xff] %v453
    %625 = vst [vmem:[#allocation5 + $0x10] sm:$0xff] %v562
    %626 = vst [vmem:[#allocation5 + $0x18] sm:$0xff] %v455
    %627 = vst [vmem:[#allocation5 + $0x20] sm:$0xff] %v457
    %628 = vst [vmem:[#allocation5 + $0x28] sm:$0xff] %v565
    %629 = vst [vmem:[#allocation5 + $0x30] sm:$0xff] %v461
    %630 = vst [vmem:[#allocation5 + $0x38] sm:$0xff] %v463
    %631 = vst [vmem:[#allocation5 + $0x40] sm:$0xff] %v570
    %632 = vst [vmem:[#allocation5 + $0x48] sm:$0xff] %v465
    %633 = vst [vmem:[#allocation5 + $0x50] sm:$0xff] %v467
    %634 = vst [vmem:[#allocation5 + $0x58] sm:$0xff] %v573
    %635 = vst [vmem:[#allocation5 + $0x60] sm:$0xff] %v471
    %636 = vst [vmem:[#allocation5 + $0x68] sm:$0xff] %v473
    %637 = vst [vmem:[#allocation5 + $0x70] sm:$0xff] %v578
    %638 = vst [vmem:[#allocation5 + $0x78] sm:$0xff] %v475
    %639 = vst [vmem:[#allocation5 + $0x80] sm:$0xff] %v477
    %640 = vst [vmem:[#allocation5 + $0x88] sm:$0xff] %v581
    %641 = vst [vmem:[#allocation5 + $0x90] sm:$0xff] %v481
    %642 = vst [vmem:[#allocation5 + $0x98] sm:$0xff] %v483
    %643 = vst [vmem:[#allocation5 + $0xa0] sm:$0xff] %v586
    %644 = vst [vmem:[#allocation5 + $0xa8] sm:$0xff] %v485
    %645 = vst [vmem:[#allocation5 + $0xb0] sm:$0xff] %v487
    %646 = vst [vmem:[#allocation5 + $0xb8] sm:$0xff] %v589
    %647 = vst [vmem:[#allocation5 + $0xc0] sm:$0xff] %v491
    %648 = vst [vmem:[#allocation5 + $0xc8] sm:$0xff] %v493
    %649 = vst [vmem:[#allocation5 + $0xd0] sm:$0xff] %v594
    %650 = vst [vmem:[#allocation5 + $0xd8] sm:$0xff] %v495
    %651 = vst [vmem:[#allocation5 + $0xe0] sm:$0xff] %v497
    %652 = vst [vmem:[#allocation5 + $0xe8] sm:$0xff] %v597
    %653 = vst [vmem:[#allocation5 + $0xf0] sm:$0xff] %v501
    %654 = vst [vmem:[#allocation5 + $0xf8] sm:$0xff] %v503
    %655 = vst [vmem:[#allocation5 + $0x100] sm:$0xff] %v602
    %656 = vst [vmem:[#allocation5 + $0x108] sm:$0xff] %v505
    %657 = vst [vmem:[#allocation5 + $0x110] sm:$0xff] %v507
    %658 = vst [vmem:[#allocation5 + $0x118] sm:$0xff] %v605
    %659 = vst [vmem:[#allocation5 + $0x120] sm:$0xff] %v511
    %660 = vst [vmem:[#allocation5 + $0x128] sm:$0xff] %v513
    %661 = vst [vmem:[#allocation5 + $0x130] sm:$0xff] %v610
    %662 = vst [vmem:[#allocation5 + $0x138] sm:$0xff] %v515
    %663 = vst [vmem:[#allocation5 + $0x140] sm:$0xff] %v517
    %664 = vst [vmem:[#allocation5 + $0x148] sm:$0xff] %v613
    %665 = vst [vmem:[#allocation5 + $0x150] sm:$0xff] %v521
    %666 = vst [vmem:[#allocation5 + $0x158] sm:$0xff] %v523
    %667 = vst [vmem:[#allocation5 + $0x160] sm:$0xff] %v618
    // Predicated region
    $region18: #{tpu_custom_call.1} parent=1 // pred_check
      _
    $region19: #{tpu_custom_call.1} parent=1 // pred_check_branch
      %669 = sbr.rel (0) target = $region21
    $region20: #{tpu_custom_call.1} parent=1 // pred_region
      %s671 = ssub.s32 5760, 5760
      %672 = vsyncadd [#allocation4], %s671
      %s673 = sshll.u32 [#allocation5], 4
      %s674 = int_to_ptr.vmem [resolvable:$true] %s673
      %679 = dma.vmem_to_hbm [thread:$0]  %s674, 5760, %s3, [#allocation4], 384, 384, 24
    $region21: #{tpu_custom_call.1} parent=1 // pred_fallthru
      _
    // Predicated region
    $region22: #{tpu_custom_call.1} parent=1 // pred_check
      _
    $region23: #{tpu_custom_call.1} parent=1 // pred_check_branch
      %681 = sbr.rel (0) target = $region25
    $region24: #{tpu_custom_call.1} parent=1 // pred_region
      %682 = dma.done [#allocation4], 5760
    $region25: #{tpu_custom_call.1} parent=1 // pred_fallthru
      _
    %683 = vsyncpa [#allocation3], 1
    %684 = vsyncpa [#allocation4], 1

</llo_original>
